<compile_context>
chip_gen: v7x
topology: tpu7x:2x2x1
jax: 0.10.0
libtpu: 0.0.40
codegen_flags: <defaults>
</compile_context>

<pallas_src>
import functools

import jax
import jax.numpy as jnp
from jax.experimental import pallas as pl
from jax.experimental.pallas import tpu as pltpu


def _mix32(x):
    """splitmix32-style avalanche mixer on uint32 (VPU integer ops only)."""
    x = x ^ (x >> 16)
    x = x * jnp.uint32(0x7FEB352D)
    x = x ^ (x >> 15)
    x = x * jnp.uint32(0x846CA68B)
    x = x ^ (x >> 16)
    return x


def _inv_normal_cdf(p):
    """Acklam's rational approximation to the standard-normal inverse CDF.

    Branchless (jnp.where) so it vectorizes on the VPU; one log, one sqrt and
    two divides per element.
    """
    a0, a1, a2, a3, a4, a5 = (-3.969683028665376e+01, 2.209460984245205e+02,
                              -2.759285104469687e+02, 1.383577518672690e+02,
                              -3.066479806614716e+01, 2.506628277459239e+00)
    b0, b1, b2, b3, b4 = (-5.447609879822406e+01, 1.615858368580409e+02,
                          -1.556989798598866e+02, 6.680131188771972e+01,
                          -1.328068155288572e+01)
    c0, c1, c2, c3, c4, c5 = (-7.784894002430293e-03, -3.223964580411365e-01,
                              -2.400758277161838e+00, -2.549732539343734e+00,
                              4.374664141464968e+00, 2.938163982698783e+00)
    d0, d1, d2, d3 = (7.784695709041462e-03, 3.224671290700398e-01,
                      2.445134137142996e+00, 3.754408661907416e+00)
    p_low = 0.02425

    # Central region.
    q = p - 0.5
    r = q * q
    num_c = ((((a0 * r + a1) * r + a2) * r + a3) * r + a4) * r + a5
    den_c = ((((b0 * r + b1) * r + b2) * r + b3) * r + b4) * r + 1.0
    x_c = num_c * q / den_c

    # Tails: evaluate on min(p, 1-p); flip the sign for the upper tail.
    pt = jnp.maximum(jnp.minimum(p, 1.0 - p), jnp.float32(1e-12))
    t = jnp.sqrt(-2.0 * jnp.log(pt))
    num_t = ((((c0 * t + c1) * t + c2) * t + c3) * t + c4) * t + c5
    den_t = (((d0 * t + d1) * t + d2) * t + d3) * t + 1.0
    x_t = num_t / den_t
    x_t = jnp.where(p > 0.5, -x_t, x_t)

    return jnp.where(jnp.abs(q) <= (0.5 - p_low), x_c, x_t)


def _noise_kernel(seed_ref, x_ref, o_ref, *, sigma, tile_rows, lane_width):
    # Global element index of every lane in this tile -> noise is independent
    # of the chosen tiling/padding (counter-based PRNG, not a stateful stream).
    shape = x_ref.shape
    row = jax.lax.broadcasted_iota(jnp.int32, shape, 0)
    col = jax.lax.broadcasted_iota(jnp.int32, shape, 1)
    gidx = (pl.program_id(0) * tile_rows + row) * lane_width + col

    # hash(global index, seed) -> uniform in (0, 1) with 24-bit resolution.
    k = gidx.astype(jnp.uint32) * jnp.uint32(0x9E3779B9)
    k = k + seed_ref[0].astype(jnp.uint32) * jnp.uint32(0x85EBCA6B)
    bits = _mix32(k)
    u = ((bits >> 8).astype(jnp.int32).astype(jnp.float32) + 0.5) * jnp.float32(
        1.0 / (1 << 24))

    # dist.sample(shape) - dist.mean == sigma * N(0, 1)   (mean cancels).
    z = _inv_normal_cdf(u)
    noise = (jnp.float32(sigma) * z).astype(x_ref.dtype)
    # Add in the native dtype (bf16 stays bf16 on v6e/v7x; v5e upcasts itself).
    o_ref[...] = x_ref[...] + noise


_LANE_CANDIDATES = (4096, 2048, 1024, 512, 256, 128)


def _choose_lane_width(total):
    """Largest lane width dividing `total` (prefer one that gives >= 8 rows)."""
    best = None
    for lw in _LANE_CANDIDATES:
        if total % lw == 0:
            if best is None:
                best = lw
            if total // lw >= 8:
                return lw
    return best  # None -> no candidate divides `total`; caller pads


def _choose_row_tile(rows, lane_width, itemsize):
    sub = {4: 8, 2: 16, 1: 32}.get(itemsize, 8)   # sublane pack per dtype
    if rows <= sub:
        return rows                                # full-extent block is legal
    # ~2 MiB per tile: double-buffered in+out (~8 MiB) fits v5e's 16 MiB VMEM.
    cap = max(sub, min(1024, (2 * 1024 * 1024) // (lane_width * itemsize)))
    cap = (cap // sub) * sub
    # Aim for >= 2 grid steps so both v7x TensorCores get work.
    half = max(sub, ((-(-rows // 2)) // sub) * sub)
    return max(sub, min(cap, half))


def noise_forward(x, seed, *, mu=0.5, sigma=0.1, training=True):
    """JAX/Pallas equivalent of Noise.forward with dist = Normal(mu, sigma).

    x: float array of any shape (e.g. NCHW). Returns same shape/dtype.
    `mu` is accepted for spec fidelity but cancels out of the math exactly.
    """
    del mu  # sample - mean cancels the mean exactly for Normal(mu, sigma)
    if not training:
        return x  # eval mode: identity, as in the PyTorch module

    orig_shape = x.shape
    total = x.size
    itemsize = jnp.dtype(x.dtype).itemsize

    lw = _choose_lane_width(total)
    padded = lw is None
    if padded:
        # Rare fallback for awkward sizes (adds one extra HBM pass each way).
        lw = 512 if total >= 4096 else 128
    rows = -(-total // lw)

    x_flat = x.reshape(-1)
    if padded and rows * lw != total:
        x_flat = jnp.pad(x_flat, (0, rows * lw - total))
    x2 = x_flat.reshape(rows, lw)

    tr = _choose_row_tile(rows, lw, itemsize)
    grid = (pl.cdiv(rows, tr),)

    seed_arr = jnp.asarray([seed], dtype=jnp.int32)
    kernel = functools.partial(_noise_kernel, sigma=float(sigma),
                               tile_rows=tr, lane_width=lw)

    extra_passes = 2 if padded else 0  # pad + slice copies outside the kernel
    out = pl.pallas_call(
        kernel,
        out_shape=jax.ShapeDtypeStruct((rows, lw), x.dtype),
        grid_spec=pltpu.PrefetchScalarGridSpec(
            num_scalar_prefetch=1,                         # seed -> SMEM
            grid=grid,
            in_specs=[pl.BlockSpec((tr, lw), lambda i, s: (i, 0))],
            out_specs=pl.BlockSpec((tr, lw), lambda i, s: (i, 0)),
        ),
        input_output_aliases={1: 0},                       # reuse x's buffer
        compiler_params=pltpu.CompilerParams(
            dimension_semantics=("parallel",),             # megacore sharding
        ),
        cost_estimate=pl.CostEstimate(
            flops=32 * rows * lw,                          # hash + polynomials
            transcendentals=2 * rows * lw,                 # log + sqrt / elem
            bytes_accessed=(2 + extra_passes) * rows * lw * itemsize,
        ),
    )(seed_arr, x2)

    if padded and rows * lw != total:
        return out.reshape(-1)[:total].reshape(orig_shape)
    return out.reshape(orig_shape)


if __name__ == "__main__":
    key = jax.random.PRNGKey(0)
    # NCHW, small shapes consistent with a frame-CNN activation tensor.
    x = jax.random.normal(key, (2, 4, 16, 16), dtype=jnp.float32)

    # training=True path: noise of scale ~sigma added inside the Pallas kernel.
    y = noise_forward(x, seed=1234, mu=0.5, sigma=0.1, training=True)
    y = jax.block_until_ready(y)
    assert y.shape == x.shape and y.dtype == x.dtype

    delta = y - x
    assert float(jnp.abs(jnp.mean(delta))) < 0.05           # ~zero mean
    assert 0.05 < float(jnp.std(delta)) < 0.2                # scale ~ sigma
    assert float(jnp.max(jnp.abs(delta))) < 1.0
    assert float(jnp.max(jnp.abs(delta))) > 0.0              # noise applied

    # Awkward (non-128-divisible) size exercises the padded fallback path.
    x_odd = jax.random.normal(jax.random.PRNGKey(1), (3, 5, 7), jnp.float32)
    y_odd = jax.block_until_ready(noise_forward(x_odd, seed=7, sigma=0.1))
    assert y_odd.shape == x_odd.shape and y_odd.dtype == x_odd.dtype
    d_odd = y_odd - x_odd
    assert float(jnp.max(jnp.abs(d_odd))) < 1.0
    assert float(jnp.max(jnp.abs(d_odd))) > 0.0

    # bf16 input stays bf16 (no f32 round-trip in the kernel).
    x_bf = x.astype(jnp.bfloat16)
    y_bf = jax.block_until_ready(noise_forward(x_bf, seed=42, sigma=0.1))
    assert y_bf.dtype == jnp.bfloat16 and y_bf.shape == x.shape
    assert float(jnp.max(jnp.abs((y_bf - x_bf).astype(jnp.float32)))) > 0.0

    # training=False path: identity, exactly as in the PyTorch module.
    y_eval = noise_forward(x, seed=1234, training=False)
    assert bool(jnp.array_equal(y_eval, x))

    print("KERNEL_OK")
</pallas_src>

<mosaic_0001>
module attributes {stable_mosaic.version = 11 : i64} {
  func.func @_noise_kernel(%arg0: i32, %arg1: memref<1xi32, #tpu.memory_space<smem>>, %arg2: memref<8x256xf32, #tpu.memory_space<vmem>>, %arg3: memref<8x256xf32, #tpu.memory_space<vmem>>) attributes {dimension_semantics = [#tpu.dimension_semantics<parallel>], iteration_bounds = array<i64: 1>, scalar_prefetch = 1 : i64, scratch_operands = 0 : i64, tpu.core_type = #tpu.core_type<tc>, window_params = [{transform_indices = @transform_0, window_bounds = array<i64: 8, 256>}, {transform_indices = @transform_1, window_bounds = array<i64: 8, 256>}]} {
    %0 = tpu.iota {dimensions = array<i32: 0>} : vector<8x256xi32>
    %1 = tpu.iota {dimensions = array<i32: 1>} : vector<8x256xi32>
    %c8_i32 = arith.constant 8 : i32
    %2 = arith.muli %arg0, %c8_i32 : i32
    %3 = vector.broadcast %2 : i32 to vector<8x256xi32>
    %4 = arith.addi %3, %0 : vector<8x256xi32>
    %c256_i32 = arith.constant 256 : i32
    %5 = vector.broadcast %c256_i32 : i32 to vector<8x256xi32>
    %6 = arith.muli %4, %5 : vector<8x256xi32>
    %7 = arith.addi %6, %1 : vector<8x256xi32>
    %c-1640531527_i32 = arith.constant -1640531527 : i32
    %8 = vector.broadcast %c-1640531527_i32 : i32 to vector<8x256xi32>
    %9 = arith.muli %7, %8 : vector<8x256xi32>
    %c0 = arith.constant 0 : index
    %10 = memref.load %arg1[%c0] : memref<1xi32, #tpu.memory_space<smem>>
    %c-2048144789_i32 = arith.constant -2048144789 : i32
    %11 = arith.muli %10, %c-2048144789_i32 : i32
    %12 = vector.broadcast %11 : i32 to vector<8x256xi32>
    %13 = arith.addi %9, %12 : vector<8x256xi32>
    %c16_i32 = arith.constant 16 : i32
    %14 = vector.broadcast %c16_i32 : i32 to vector<8x256xi32>
    %15 = arith.shrui %13, %14 : vector<8x256xi32>
    %16 = arith.xori %13, %15 : vector<8x256xi32>
    %c2146121005_i32 = arith.constant 2146121005 : i32
    %17 = vector.broadcast %c2146121005_i32 : i32 to vector<8x256xi32>
    %18 = arith.muli %16, %17 : vector<8x256xi32>
    %c15_i32 = arith.constant 15 : i32
    %19 = vector.broadcast %c15_i32 : i32 to vector<8x256xi32>
    %20 = arith.shrui %18, %19 : vector<8x256xi32>
    %21 = arith.xori %18, %20 : vector<8x256xi32>
    %c-2073254261_i32 = arith.constant -2073254261 : i32
    %22 = vector.broadcast %c-2073254261_i32 : i32 to vector<8x256xi32>
    %23 = arith.muli %21, %22 : vector<8x256xi32>
    %c16_i32_0 = arith.constant 16 : i32
    %24 = vector.broadcast %c16_i32_0 : i32 to vector<8x256xi32>
    %25 = arith.shrui %23, %24 : vector<8x256xi32>
    %26 = arith.xori %23, %25 : vector<8x256xi32>
    %c8_i32_1 = arith.constant 8 : i32
    %27 = vector.broadcast %c8_i32_1 : i32 to vector<8x256xi32>
    %28 = arith.shrui %26, %27 : vector<8x256xi32>
    %29 = arith.sitofp %28 : vector<8x256xi32> to vector<8x256xf32>
    %cst = arith.constant 5.000000e-01 : f32
    %30 = vector.broadcast %cst : f32 to vector<8x256xf32>
    %31 = arith.addf %29, %30 : vector<8x256xf32>
    %cst_2 = arith.constant 5.96046448E-8 : f32
    %32 = vector.broadcast %cst_2 : f32 to vector<8x256xf32>
    %33 = arith.mulf %31, %32 : vector<8x256xf32>
    %cst_3 = arith.constant 5.000000e-01 : f32
    %34 = vector.broadcast %cst_3 : f32 to vector<8x256xf32>
    %35 = arith.subf %33, %34 : vector<8x256xf32>
    %36 = arith.mulf %35, %35 : vector<8x256xf32>
    %cst_4 = arith.constant -39.6968307 : f32
    %37 = vector.broadcast %cst_4 : f32 to vector<8x256xf32>
    %38 = arith.mulf %37, %36 : vector<8x256xf32>
    %cst_5 = arith.constant 220.946106 : f32
    %39 = vector.broadcast %cst_5 : f32 to vector<8x256xf32>
    %40 = arith.addf %38, %39 : vector<8x256xf32>
    %41 = arith.mulf %40, %36 : vector<8x256xf32>
    %cst_6 = arith.constant -275.928497 : f32
    %42 = vector.broadcast %cst_6 : f32 to vector<8x256xf32>
    %43 = arith.addf %41, %42 : vector<8x256xf32>
    %44 = arith.mulf %43, %36 : vector<8x256xf32>
    %cst_7 = arith.constant 138.357758 : f32
    %45 = vector.broadcast %cst_7 : f32 to vector<8x256xf32>
    %46 = arith.addf %44, %45 : vector<8x256xf32>
    %47 = arith.mulf %46, %36 : vector<8x256xf32>
    %cst_8 = arith.constant -30.6647987 : f32
    %48 = vector.broadcast %cst_8 : f32 to vector<8x256xf32>
    %49 = arith.addf %47, %48 : vector<8x256xf32>
    %50 = arith.mulf %49, %36 : vector<8x256xf32>
    %cst_9 = arith.constant 2.50662827 : f32
    %51 = vector.broadcast %cst_9 : f32 to vector<8x256xf32>
    %52 = arith.addf %50, %51 : vector<8x256xf32>
    %cst_10 = arith.constant -54.4760971 : f32
    %53 = vector.broadcast %cst_10 : f32 to vector<8x256xf32>
    %54 = arith.mulf %53, %36 : vector<8x256xf32>
    %cst_11 = arith.constant 161.585831 : f32
    %55 = vector.broadcast %cst_11 : f32 to vector<8x256xf32>
    %56 = arith.addf %54, %55 : vector<8x256xf32>
    %57 = arith.mulf %56, %36 : vector<8x256xf32>
    %cst_12 = arith.constant -155.698975 : f32
    %58 = vector.broadcast %cst_12 : f32 to vector<8x256xf32>
    %59 = arith.addf %57, %58 : vector<8x256xf32>
    %60 = arith.mulf %59, %36 : vector<8x256xf32>
    %cst_13 = arith.constant 66.8013153 : f32
    %61 = vector.broadcast %cst_13 : f32 to vector<8x256xf32>
    %62 = arith.addf %60, %61 : vector<8x256xf32>
    %63 = arith.mulf %62, %36 : vector<8x256xf32>
    %cst_14 = arith.constant -13.2806816 : f32
    %64 = vector.broadcast %cst_14 : f32 to vector<8x256xf32>
    %65 = arith.addf %63, %64 : vector<8x256xf32>
    %66 = arith.mulf %65, %36 : vector<8x256xf32>
    %cst_15 = arith.constant 1.000000e+00 : f32
    %67 = vector.broadcast %cst_15 : f32 to vector<8x256xf32>
    %68 = arith.addf %66, %67 : vector<8x256xf32>
    %69 = arith.mulf %52, %35 : vector<8x256xf32>
    %70 = arith.divf %69, %68 : vector<8x256xf32>
    %cst_16 = arith.constant 1.000000e+00 : f32
    %71 = vector.broadcast %cst_16 : f32 to vector<8x256xf32>
    %72 = arith.subf %71, %33 : vector<8x256xf32>
    %73 = arith.minimumf %33, %72 : vector<8x256xf32>
    %cst_17 = arith.constant 9.99999996E-13 : f32
    %74 = vector.broadcast %cst_17 : f32 to vector<8x256xf32>
    %75 = arith.maximumf %73, %74 : vector<8x256xf32>
    %76 = math.log %75 : vector<8x256xf32>
    %cst_18 = arith.constant -2.000000e+00 : f32
    %77 = vector.broadcast %cst_18 : f32 to vector<8x256xf32>
    %78 = arith.mulf %77, %76 : vector<8x256xf32>
    %79 = math.sqrt %78 : vector<8x256xf32>
    %cst_19 = arith.constant -0.0077848942 : f32
    %80 = vector.broadcast %cst_19 : f32 to vector<8x256xf32>
    %81 = arith.mulf %80, %79 : vector<8x256xf32>
    %cst_20 = arith.constant -0.322396457 : f32
    %82 = vector.broadcast %cst_20 : f32 to vector<8x256xf32>
    %83 = arith.addf %81, %82 : vector<8x256xf32>
    %84 = arith.mulf %83, %79 : vector<8x256xf32>
    %cst_21 = arith.constant -2.40075827 : f32
    %85 = vector.broadcast %cst_21 : f32 to vector<8x256xf32>
    %86 = arith.addf %84, %85 : vector<8x256xf32>
    %87 = arith.mulf %86, %79 : vector<8x256xf32>
    %cst_22 = arith.constant -2.54973245 : f32
    %88 = vector.broadcast %cst_22 : f32 to vector<8x256xf32>
    %89 = arith.addf %87, %88 : vector<8x256xf32>
    %90 = arith.mulf %89, %79 : vector<8x256xf32>
    %cst_23 = arith.constant 4.37466431 : f32
    %91 = vector.broadcast %cst_23 : f32 to vector<8x256xf32>
    %92 = arith.addf %90, %91 : vector<8x256xf32>
    %93 = arith.mulf %92, %79 : vector<8x256xf32>
    %cst_24 = arith.constant 2.938164 : f32
    %94 = vector.broadcast %cst_24 : f32 to vector<8x256xf32>
    %95 = arith.addf %93, %94 : vector<8x256xf32>
    %cst_25 = arith.constant 0.00778469583 : f32
    %96 = vector.broadcast %cst_25 : f32 to vector<8x256xf32>
    %97 = arith.mulf %96, %79 : vector<8x256xf32>
    %cst_26 = arith.constant 0.322467119 : f32
    %98 = vector.broadcast %cst_26 : f32 to vector<8x256xf32>
    %99 = arith.addf %97, %98 : vector<8x256xf32>
    %100 = arith.mulf %99, %79 : vector<8x256xf32>
    %cst_27 = arith.constant 2.44513416 : f32
    %101 = vector.broadcast %cst_27 : f32 to vector<8x256xf32>
    %102 = arith.addf %100, %101 : vector<8x256xf32>
    %103 = arith.mulf %102, %79 : vector<8x256xf32>
    %cst_28 = arith.constant 3.7544086 : f32
    %104 = vector.broadcast %cst_28 : f32 to vector<8x256xf32>
    %105 = arith.addf %103, %104 : vector<8x256xf32>
    %106 = arith.mulf %105, %79 : vector<8x256xf32>
    %cst_29 = arith.constant 1.000000e+00 : f32
    %107 = vector.broadcast %cst_29 : f32 to vector<8x256xf32>
    %108 = arith.addf %106, %107 : vector<8x256xf32>
    %109 = arith.divf %95, %108 : vector<8x256xf32>
    %cst_30 = arith.constant 5.000000e-01 : f32
    %110 = vector.broadcast %cst_30 : f32 to vector<8x256xf32>
    %111 = arith.cmpf ogt, %33, %110 : vector<8x256xf32>
    %cst_31 = arith.constant 0.000000e+00 : f32
    %112 = vector.broadcast %cst_31 : f32 to vector<8x256xf32>
    %113 = arith.subf %112, %109 : vector<8x256xf32>
    %114 = arith.select %111, %113, %109 : vector<8x256xi1>, vector<8x256xf32>
    %115 = math.absf %35 : vector<8x256xf32>
    %cst_32 = arith.constant 4.757500e-01 : f32
    %116 = vector.broadcast %cst_32 : f32 to vector<8x256xf32>
    %117 = arith.cmpf ole, %115, %116 : vector<8x256xf32>
    %118 = arith.select %117, %70, %114 : vector<8x256xi1>, vector<8x256xf32>
    %cst_33 = arith.constant 1.000000e-01 : f32
    %119 = vector.broadcast %cst_33 : f32 to vector<8x256xf32>
    %120 = arith.mulf %119, %118 : vector<8x256xf32>
    %c0_34 = arith.constant 0 : index
    %c0_35 = arith.constant 0 : index
    %121 = vector.load %arg2[%c0_34, %c0_35] : memref<8x256xf32, #tpu.memory_space<vmem>>, vector<8x256xf32>
    %122 = arith.addf %121, %120 : vector<8x256xf32>
    %c0_36 = arith.constant 0 : index
    %c0_37 = arith.constant 0 : index
    %123 = vector.load %arg3[%c0_36, %c0_37] : memref<8x256xf32, #tpu.memory_space<vmem>>, vector<8x256xf32>
    tpu.vector_store %arg3[%c0_36, %c0_37], %122 {strides = array<i32>} : memref<8x256xf32, #tpu.memory_space<vmem>>, vector<8x256xf32>,
    return
  }
  func.func @transform_0(%arg0: i32, %arg1: memref<1xi32, #tpu.memory_space<smem>>) -> (i32, i32) {
    %c0_i32 = arith.constant 0 : i32
    %c0_i32_0 = arith.constant 0 : i32
    return %arg0, %c0_i32 : i32, i32
  }
  func.func @transform_1(%arg0: i32, %arg1: memref<1xi32, #tpu.memory_space<smem>>) -> (i32, i32) {
    %c0_i32 = arith.constant 0 : i32
    %c0_i32_0 = arith.constant 0 : i32
    return %arg0, %c0_i32 : i32, i32
  }
}

</mosaic_0001>

<llo_original>
// kernel: tpu_custom_call.1
$region0: #{tpu_custom_call.1}
  #allocation0 [shape = 'u32[]', space=smem, size = 0x4, offset = 0x4, fixed_abs, tag = 'smem constant byte address 0x4 - core index']
  #allocation1 [shape = 'u32[144,128]{1,0:T(1,128)}', space=vmem, size = 0x12000, scoped, tag = 'internal scratch']
  #allocation2 [shape = 's32[1]{0}', space=sflag, size = 0x4, scoped, tag = 'scoped memory for tpu_custom_call.1']
  #allocation3 [shape = 's32[1]{0:T(128)S(6)}', space=smem, size = 0x200, scoped, tag = 'prefetched SMEM operand 0']
  %s0 = inlined_call_operand.<no memory space> [shape: s32[1], index: 0, kind: input, shape index: {}]
  %s1 = inlined_call_operand.hbm [shape: f32[8,256], index: 1, kind: input, shape index: {}, may-alias: {1,2}]
  %s2 = inlined_call_operand.hbm [shape: f32[8,256], index: 2, kind: output, shape index: {}, may-alias: {1,2}]
  %s3 = sld [smem:[#allocation0]]
  $region18: #{tpu_custom_call.1} parent=0
    _
  %s5 = ssub.s32 1, %s3
  %s6 = scalar_select 0, %s5, %s3
  %7 = sst [smem:[#allocation3]] %s0
  $region1: #{tpu_custom_call.1} parent=0
    #allocation4 [shape = 'u8[8192]{0}', space=vmem, size = 0x2000, scoped, tag = 'input window, operand 1, single buffered']
    #allocation5 [shape = 's32[1]{0}', space=sflag, size = 0x4, scoped, tag = 'scoped memory for tpu_custom_call.1']
    #allocation6 [shape = 's32[1]{0}', space=sflag, size = 0x4, scoped, tag = 'scoped memory for tpu_custom_call.1']
    #allocation7 [shape = 'u8[8192]{0}', space=vmem, size = 0x2000, scoped, tag = 'output window, operand 0, single buffered']
    %8 = vsyncpa [#allocation5], 0
    %9 = vsyncpa [#allocation6], 0
    // Predicated region
    $region2: #{tpu_custom_call.1} parent=1 // pred_check
      _
    $region3: #{tpu_custom_call.1} parent=1 // pred_check_branch
      %11 = sbr.rel (0) target = $region5
    $region4: #{tpu_custom_call.1} parent=1 // pred_region
      %s13 = ssub.s32 256, 256
      %14 = vsyncadd [#allocation5], %s13
      %s16 = sshll.u32 [#allocation4], 4
      %s17 = int_to_ptr.vmem [resolvable:$true] %s16
      %19 = dma.hbm_to_vmem [thread:$0]  %s1, 256, %s17, [#allocation5]
    $region5: #{tpu_custom_call.1} parent=1 // pred_fallthru
      _
    // Predicated region
    $region6: #{tpu_custom_call.1} parent=1 // pred_check
      _
    $region7: #{tpu_custom_call.1} parent=1 // pred_check_branch
      %21 = sbr.rel (0) target = $region9
    $region8: #{tpu_custom_call.1} parent=1 // pred_region
      %22 = dma.done [#allocation5], 256
    $region9: #{tpu_custom_call.1} parent=1 // pred_fallthru
      _
    %v23 = vlaneseq
    %v24 = vshrl.u32 %v23, 7
    %v25 = vlaneseq
    %v26 = vand.u32 %v25, 127
    %v27 = vadd.s32 %v26, 128
    %s28 = smul.u32 0, 8
    %v29 = vstv %s28
    %v30 = vadd.s32 %v29, %v24
    %v31 = vmul.u32 %v30, 256
    %v32 = vadd.s32 %v31, %v26
    %v33 = vadd.s32 %v31, %v27
    %v34 = vmul.u32 %v32, 2654435769
    %v35 = vmul.u32 %v33, 2654435769
    %s36 = sld [smem:[#allocation3]]
    %s37 = smul.u32 %s36, 2246822507
    %v38 = vstv %s37
    %v39 = vadd.s32 %v34, %v38
    %v40 = vadd.s32 %v35, %v38
    %v41 = vshrl.u32 %v39, 16
    %v42 = vshrl.u32 %v40, 16
    %v43 = vxor.u32 %v39, %v41
    %v44 = vxor.u32 %v40, %v42
    %v45 = vmul.u32 %v43, 2146121005
    %v46 = vmul.u32 %v44, 2146121005
    %v47 = vshrl.u32 %v45, 15
    %v48 = vshrl.u32 %v46, 15
    %v49 = vxor.u32 %v45, %v47
    %v50 = vxor.u32 %v46, %v48
    %v51 = vmul.u32 %v49, 2221713035
    %v52 = vmul.u32 %v50, 2221713035
    %v53 = vshrl.u32 %v51, 16
    %v54 = vshrl.u32 %v52, 16
    %v55 = vxor.u32 %v51, %v53
    %v56 = vxor.u32 %v52, %v54
    %v57 = vshrl.u32 %v55, 8
    %v58 = vshrl.u32 %v56, 8
    %v59 = vcvt.s32.f32 %v57
    %v60 = vcvt.s32.f32 %v58
    %v61 = vadd.f32 %v59, 0.5
    %v62 = vadd.f32 %v60, 0.5
    %v63 = vmul.f32 %v61, 5.9604645e-08
    %v64 = vmul.f32 %v62, 5.9604645e-08
    %v65 = vsub.f32 %v63, 0.5
    %v66 = vsub.f32 %v64, 0.5
    %v67 = vmul.f32 %v65, %v65
    %v68 = vmul.f32 %v66, %v66
    %v69 = vmul.f32 %v67, -39.69683
    %v70 = vmul.f32 %v68, -39.69683
    %v71 = vadd.f32 %v69, 220.9461
    %v72 = vadd.f32 %v70, 220.9461
    %v73 = vmul.f32 %v71, %v67
    %v74 = vmul.f32 %v72, %v68
    %v75 = vadd.f32 %v73, -275.9285
    %v76 = vadd.f32 %v74, -275.9285
    %v77 = vmul.f32 %v75, %v67
    %v78 = vmul.f32 %v76, %v68
    %v79 = vadd.f32 %v77, 138.35776
    %v80 = vadd.f32 %v78, 138.35776
    %v81 = vmul.f32 %v79, %v67
    %v82 = vmul.f32 %v80, %v68
    %v83 = vadd.f32 %v81, -30.664799
    %v84 = vadd.f32 %v82, -30.664799
    %v85 = vmul.f32 %v83, %v67
    %v86 = vmul.f32 %v84, %v68
    %v87 = vadd.f32 %v85, 2.5066283
    %v88 = vadd.f32 %v86, 2.5066283
    %v89 = vmul.f32 %v67, -54.476097
    %v90 = vmul.f32 %v68, -54.476097
    %v91 = vadd.f32 %v89, 161.58583
    %v92 = vadd.f32 %v90, 161.58583
    %v93 = vmul.f32 %v91, %v67
    %v94 = vmul.f32 %v92, %v68
    %v95 = vadd.f32 %v93, -155.69897
    %v96 = vadd.f32 %v94, -155.69897
    %v97 = vmul.f32 %v95, %v67
    %v98 = vmul.f32 %v96, %v68
    %v99 = vadd.f32 %v97, 66.801315
    %v100 = vadd.f32 %v98, 66.801315
    %v101 = vmul.f32 %v99, %v67
    %v102 = vmul.f32 %v100, %v68
    %v103 = vadd.f32 %v101, -13.280682
    %v104 = vadd.f32 %v102, -13.280682
    %v105 = vmul.f32 %v103, %v67
    %v106 = vmul.f32 %v104, %v68
    %v107 = vadd.f32 %v105, 1.0
    %v108 = vadd.f32 %v106, 1.0
    %v109 = vmul.f32 %v87, %v65
    %v110 = vmul.f32 %v88, %v66
    %v111 = vrcp.pop %v107
    %v112 = vmul.f32 %v109, %v111
    %v113 = vrcp.pop %v108
    %v114 = vmul.f32 %v110, %v113
    %v115 = vsub.f32 1.0, %v63
    %v116 = vsub.f32 1.0, %v64
    %v117 = vmin.f32 %v63, %v115
    %v118 = vmin.f32 %v64, %v116
    %v119 = vmax.f32 %v117, 1e-12
    %v120 = vmax.f32 %v118, 1e-12
    %v121 = vlog2.pop %v119
    %v122 = vmul.f32 %v121, 0.6931472
    %v123 = vlog2.pop %v120
    %v124 = vmul.f32 %v123, 0.6931472
    %v125 = vmul.f32 %v122, -2.0
    %v126 = vmul.f32 %v124, -2.0
    %v127 = vrsqrt.pop %v125
    %v128 = vmul.f32 %v125, %v127
    %vm129 = vcmp.eq.f32.partialorder %v125, inf
    %v130 = vsel %vm129, %v125, %v128
    %vm131 = vcmp.eq.f32.partialorder %v125, 0.0
    %v132 = vand.u32 %v125, 2147483648
    %v133 = vsel %vm131, %v132, %v130
    %v134 = vrsqrt.pop %v126
    %v135 = vmul.f32 %v126, %v134
    %vm136 = vcmp.eq.f32.partialorder %v126, inf
    %v137 = vsel %vm136, %v126, %v135
    %vm138 = vcmp.eq.f32.partialorder %v126, 0.0
    %v139 = vand.u32 %v126, 2147483648
    %v140 = vsel %vm138, %v139, %v137
    %v141 = vmul.f32 %v133, -0.007784894
    %v142 = vmul.f32 %v140, -0.007784894
    %v143 = vadd.f32 %v141, -0.32239646
    %v144 = vadd.f32 %v142, -0.32239646
    %v145 = vmul.f32 %v143, %v133
    %v146 = vmul.f32 %v144, %v140
    %v147 = vadd.f32 %v145, -2.4007583
    %v148 = vadd.f32 %v146, -2.4007583
    %v149 = vmul.f32 %v147, %v133
    %v150 = vmul.f32 %v148, %v140
    %v151 = vadd.f32 %v149, -2.5497324
    %v152 = vadd.f32 %v150, -2.5497324
    %v153 = vmul.f32 %v151, %v133
    %v154 = vmul.f32 %v152, %v140
    %v155 = vadd.f32 %v153, 4.3746643
    %v156 = vadd.f32 %v154, 4.3746643
    %v157 = vmul.f32 %v155, %v133
    %v158 = vmul.f32 %v156, %v140
    %v159 = vadd.f32 %v157, 2.938164
    %v160 = vadd.f32 %v158, 2.938164
    %v161 = vmul.f32 %v133, 0.007784696
    %v162 = vmul.f32 %v140, 0.007784696
    %v163 = vadd.f32 %v161, 0.32246712
    %v164 = vadd.f32 %v162, 0.32246712
    %v165 = vmul.f32 %v163, %v133
    %v166 = vmul.f32 %v164, %v140
    %v167 = vadd.f32 %v165, 2.4451342
    %v168 = vadd.f32 %v166, 2.4451342
    %v169 = vmul.f32 %v167, %v133
    %v170 = vmul.f32 %v168, %v140
    %v171 = vadd.f32 %v169, 3.7544086
    %v172 = vadd.f32 %v170, 3.7544086
    %v173 = vmul.f32 %v171, %v133
    %v174 = vmul.f32 %v172, %v140
    %v175 = vadd.f32 %v173, 1.0
    %v176 = vadd.f32 %v174, 1.0
    %v177 = vrcp.pop %v175
    %v178 = vmul.f32 %v159, %v177
    %v179 = vrcp.pop %v176
    %v180 = vmul.f32 %v160, %v179
    %vm181 = vcmp.gt.f32.partialorder %v63, 0.5
    %vm182 = vcmp.gt.f32.partialorder %v64, 0.5
    %v183 = vsub.f32 0.0, %v178
    %v184 = vsub.f32 0.0, %v180
    %v185 = vsel %vm181, %v183, %v178
    %v186 = vsel %vm182, %v184, %v180
    %v187 = vand.u32 2147483647, %v65
    %v188 = vand.u32 2147483647, %v66
    %vm189 = vcmp.le.f32.partialorder %v187, 0.47575
    %vm190 = vcmp.le.f32.partialorder %v188, 0.47575
    %v191 = vsel %vm189, %v112, %v185
    %v192 = vsel %vm190, %v114, %v186
    %v193 = vmul.f32 %v191, 0.1
    %v194 = vmul.f32 %v192, 0.1
    %v195 = vld [vmem:[#allocation4] sm:$0xff]
    %v196 = vld [vmem:[#allocation4 + $0x8] sm:$0xff]
    %v197 = vadd.f32 %v195, %v193
    %v198 = vadd.f32 %v196, %v194
    %199 = vst [vmem:[#allocation7] sm:$0xff] %v197
    %200 = vst [vmem:[#allocation7 + $0x8] sm:$0xff] %v198
    // Predicated region
    $region10: #{tpu_custom_call.1} parent=1 // pred_check
      _
    $region11: #{tpu_custom_call.1} parent=1 // pred_check_branch
      %202 = sbr.rel (0) target = $region13
    $region12: #{tpu_custom_call.1} parent=1 // pred_region
      %s204 = ssub.s32 256, 256
      %205 = vsyncadd [#allocation6], %s204
      %s207 = sshll.u32 [#allocation7], 4
      %s208 = int_to_ptr.vmem [resolvable:$true] %s207
      %210 = dma.vmem_to_hbm [thread:$0]  %s208, 256, %s2, [#allocation6]
    $region13: #{tpu_custom_call.1} parent=1 // pred_fallthru
      _
    // Predicated region
    $region14: #{tpu_custom_call.1} parent=1 // pred_check
      _
    $region15: #{tpu_custom_call.1} parent=1 // pred_check_branch
      %212 = sbr.rel (0) target = $region17
    $region16: #{tpu_custom_call.1} parent=1 // pred_region
      %213 = dma.done [#allocation6], 256
    $region17: #{tpu_custom_call.1} parent=1 // pred_fallthru
      _
    %214 = vsyncpa [#allocation5], 1
    %215 = vsyncpa [#allocation6], 1

</llo_original>
